<compile_context>
chip_gen: v7x
topology: tpu7x:2x2x1
jax: 0.10.0
libtpu: 0.0.40
codegen_flags: <defaults>
</compile_context>

<pallas_src>
import functools

import jax
import jax.numpy as jnp
from jax.experimental import pallas as pl
from jax.experimental.pallas import tpu as pltpu

LANE = 128               # vreg lane width (last dim of every tile)
SUBLANE = 8              # f32 sublane packing
MAX_BLOCK_ROWS = 4096    # 4096 x 128 f32 = 2 MiB per input tile per grid step
REDUCE_CHUNK_ROWS = 256  # in-kernel reduce granularity (~128 KiB f32 temps)


def _asym_sq_err_partial_kernel(yt_ref, yp_ref, out_ref, *, penalty, rows_valid,
                                block_rows, chunk_rows):
    """One grid step: asymmetric squared error over a (block_rows, 128) tile,
    reduced chunk-by-chunk (VPU-only) to an (8, 128) partial sum written to
    this step's private output slot."""
    i = pl.program_id(0)
    nchunks = block_rows // chunk_rows

    if rows_valid is not None:
        # Row iota hoisted out of the chunk loop; compared per chunk against a
        # scalar limit (no lane iota, no *LANE multiply, no add per element).
        row = jax.lax.broadcasted_iota(jnp.int32, (chunk_rows, LANE), 0)

    acc = jnp.zeros((SUBLANE, LANE), jnp.float32)
    for c in range(nchunks):               # static offsets -> free ref views
        r0 = c * chunk_rows
        yt = yt_ref[pl.ds(r0, chunk_rows), :].astype(jnp.float32)
        yp = yp_ref[pl.ds(r0, chunk_rows), :].astype(jnp.float32)
        d = yt - yp
        # Fold the asymmetric penalty into a single weight multiply.
        err = (d * d) * jnp.where(yt == 0.0, penalty, 1.0)
        if rows_valid is not None:
            # Zero rows whose global row index is past the true row count
            # (covers the garbage DMA'd for the partial last block).
            limit = rows_valid - (i * block_rows + r0)
            err = jnp.where(row < limit, err, 0.0)
        # (chunk, 128) -> (chunk//8, 8, 128): the axis-0 sum is pure vreg adds.
        acc = acc + err.reshape(chunk_rows // SUBLANE, SUBLANE, LANE).sum(axis=0)

    out_ref[...] = acc


def _sublane_align(dtype):
    # f32 -> 8 sublanes per vreg tile, bf16/f16 -> 16, int8/fp8 -> 32.
    itemsize = jnp.dtype(dtype).itemsize
    return SUBLANE * max(1, 4 // int(itemsize))


def _round_up(x, m):
    return ((x + m - 1) // m) * m


def assymetric_rmse(y_pred, y_true, penalty=3.5):
    penalty = float(penalty)  # python scalar -> baked constant
    yt = y_true.reshape(-1)
    yp = y_pred.reshape(-1)
    n = yt.shape[0]

    rows = n // LANE           # lane-aligned prefix only; no jnp.pad HBM copy
    n_aligned = rows * LANE

    # <=127-element lane tail: negligible work, reduced in plain JAX.
    if n_aligned != n:
        yt_t = yt[n_aligned:].astype(jnp.float32)
        yp_t = yp[n_aligned:].astype(jnp.float32)
        dt = yt_t - yp_t
        tail_sse = jnp.sum(jnp.where(yt_t == 0.0, penalty * dt * dt, dt * dt),
                           dtype=jnp.float32)
        yt2 = yt[:n_aligned].reshape(rows, LANE)
        yp2 = yp[:n_aligned].reshape(rows, LANE)
    else:
        tail_sse = jnp.float32(0.0)
        yt2 = yt.reshape(rows, LANE)   # pure bitcast, zero copy
        yp2 = yp.reshape(rows, LANE)

    if rows == 0:
        return jnp.sqrt(tail_sse / jnp.float32(n))

    align = max(_sublane_align(yt.dtype), _sublane_align(yp.dtype))
    # >= 2 balanced grid blocks when possible (feeds both TCs on v7x), tile
    # capped at 2 MiB/input (f32) -> ~8 MiB of double-buffered input DMA,
    # within default scoped VMEM on v5e/v6e/v7x.
    block_rows = min(MAX_BLOCK_ROWS, _round_up(pl.cdiv(rows, 2), align))
    num_blocks = pl.cdiv(rows, block_rows)

    # Chunked in-kernel reduce only when it divides the block cleanly;
    # otherwise the block is small enough to reduce directly.
    if block_rows > REDUCE_CHUNK_ROWS and block_rows % REDUCE_CHUNK_ROWS == 0:
        chunk_rows = REDUCE_CHUNK_ROWS
    else:
        chunk_rows = block_rows

    # Row mask only needed if the grid's coverage exceeds the true row count.
    rows_valid = None if num_blocks * block_rows == rows else rows

    partials = pl.pallas_call(
        functools.partial(
            _asym_sq_err_partial_kernel,
            penalty=penalty,
            rows_valid=rows_valid,
            block_rows=block_rows,
            chunk_rows=chunk_rows,
        ),
        out_shape=jax.ShapeDtypeStruct((num_blocks * SUBLANE, LANE), jnp.float32),
        grid=(num_blocks,),
        in_specs=[
            pl.BlockSpec((block_rows, LANE), lambda i: (i, 0)),
            pl.BlockSpec((block_rows, LANE), lambda i: (i, 0)),
        ],
        out_specs=pl.BlockSpec((SUBLANE, LANE), lambda i: (i, 0)),
        compiler_params=pltpu.CompilerParams(
            # Each block writes its own output slot -> true parallel axis,
            # shardable across both TensorCores on v7x.
            dimension_semantics=("parallel",),
        ),
    )(yt2, yp2)

    # Tiny finalization in plain JAX: mean over the TRUE element count, sqrt.
    sse = jnp.sum(partials, dtype=jnp.float32) + tail_sse
    return jnp.sqrt(sse / jnp.float32(n))


def _reference(y_pred, y_true, penalty=3.5):
    yt = y_true.astype(jnp.float32).reshape(-1)
    yp = y_pred.astype(jnp.float32).reshape(-1)
    err = jnp.where(yt == 0.0, penalty * (yt - yp) ** 2, (yt - yp) ** 2)
    return jnp.sqrt(jnp.mean(err))


if __name__ == "__main__":
    penalty = 3.5

    # 1) Small lane-aligned case (typical (N, C, H, W) prediction tensor):
    #    2 blocks, no masking, single-chunk reduce.
    k1, k2, k3 = jax.random.split(jax.random.PRNGKey(0), 3)
    shape = (2, 4, 16, 16)
    y_pred = jax.random.normal(k1, shape, dtype=jnp.float32)
    y_true = jax.random.normal(k2, shape, dtype=jnp.float32)
    y_true = jnp.where(jax.random.bernoulli(k3, p=0.3, shape=shape), 0.0, y_true)
    loss = jax.block_until_ready(assymetric_rmse(y_pred, y_true, penalty))
    ref = jax.block_until_ready(_reference(y_pred, y_true, penalty))
    assert jnp.allclose(loss, ref, rtol=2e-5, atol=1e-6), (loss, ref)

    # 2) Ragged case: n % 128 != 0, partial last block row-masked in-kernel,
    #    <=127-element tail reduced in plain JAX (no whole-array pad).
    k4, k5, k6 = jax.random.split(jax.random.PRNGKey(1), 3)
    shape2 = (2, 600, 150)   # 180000 = 1406*128 + 32
    y_pred2 = jax.random.normal(k4, shape2, dtype=jnp.float32)
    y_true2 = jax.random.normal(k5, shape2, dtype=jnp.float32)
    y_true2 = jnp.where(jax.random.bernoulli(k6, p=0.25, shape=shape2), 0.0, y_true2)
    loss2 = jax.block_until_ready(assymetric_rmse(y_pred2, y_true2, penalty))
    ref2 = jax.block_until_ready(_reference(y_pred2, y_true2, penalty))
    assert jnp.allclose(loss2, ref2, rtol=2e-5, atol=1e-6), (loss2, ref2)

    # 3) Larger ragged case exercising the chunked in-kernel reduce
    #    (block_rows=512 -> 2 chunks of 256 rows) with 2 balanced blocks.
    k7, k8, k9 = jax.random.split(jax.random.PRNGKey(2), 3)
    shape3 = (2, 65556)      # 131112 = 1024*128 + 40
    y_pred3 = jax.random.normal(k7, shape3, dtype=jnp.float32)
    y_true3 = jax.random.normal(k8, shape3, dtype=jnp.float32)
    y_true3 = jnp.where(jax.random.bernoulli(k9, p=0.25, shape=shape3), 0.0, y_true3)
    loss3 = jax.block_until_ready(assymetric_rmse(y_pred3, y_true3, penalty))
    ref3 = jax.block_until_ready(_reference(y_pred3, y_true3, penalty))
    assert jnp.allclose(loss3, ref3, rtol=2e-5, atol=1e-6), (loss3, ref3)

    print("KERNEL_OK")
</pallas_src>

<mosaic_0001>
module attributes {stable_mosaic.version = 11 : i64} {
  func.func @_asym_sq_err_partial_kernel(%arg0: i32, %arg1: memref<8x128xf32, #tpu.memory_space<vmem>>, %arg2: memref<8x128xf32, #tpu.memory_space<vmem>>, %arg3: memref<8x128xf32, #tpu.memory_space<vmem>>) attributes {dimension_semantics = [#tpu.dimension_semantics<parallel>], iteration_bounds = array<i64: 2>, scalar_prefetch = 0 : i64, scratch_operands = 0 : i64, tpu.core_type = #tpu.core_type<tc>, window_params = [{transform_indices = @transform_0, window_bounds = array<i64: 8, 128>}, {transform_indices = @transform_1, window_bounds = array<i64: 8, 128>}, {transform_indices = @transform_2, window_bounds = array<i64: 8, 128>}]} {
    %cst = arith.constant 0.000000e+00 : f32
    %0 = vector.broadcast %cst : f32 to vector<8x128xf32>
    %c0 = arith.constant 0 : index
    %c0_0 = arith.constant 0 : index
    %1 = vector.load %arg1[%c0, %c0_0] : memref<8x128xf32, #tpu.memory_space<vmem>>, vector<8x128xf32>
    %c0_1 = arith.constant 0 : index
    %c0_2 = arith.constant 0 : index
    %2 = vector.load %arg2[%c0_1, %c0_2] : memref<8x128xf32, #tpu.memory_space<vmem>>, vector<8x128xf32>
    %3 = arith.subf %1, %2 : vector<8x128xf32>
    %4 = arith.mulf %3, %3 : vector<8x128xf32>
    %cst_3 = arith.constant 0.000000e+00 : f32
    %5 = vector.broadcast %cst_3 : f32 to vector<8x128xf32>
    %6 = arith.cmpf oeq, %1, %5 : vector<8x128xf32>
    %cst_4 = arith.constant 3.500000e+00 : f32
    %cst_5 = arith.constant 1.000000e+00 : f32
    %7 = vector.broadcast %cst_4 : f32 to vector<8x128xf32>
    %8 = vector.broadcast %cst_5 : f32 to vector<8x128xf32>
    %9 = arith.select %6, %7, %8 : vector<8x128xi1>, vector<8x128xf32>
    %10 = arith.mulf %4, %9 : vector<8x128xf32>
    %11 = vector.shape_cast %10 : vector<8x128xf32> to vector<1x8x128xf32>
    %cst_6 = arith.constant dense<0.000000e+00> : vector<8x128xf32>
    %12 = vector.multi_reduction <add>, %11, %cst_6 [0] : vector<1x8x128xf32> to vector<8x128xf32>
    %13 = arith.addf %0, %12 : vector<8x128xf32>
    %c0_7 = arith.constant 0 : index
    %c0_8 = arith.constant 0 : index
    %14 = vector.load %arg3[%c0_7, %c0_8] : memref<8x128xf32, #tpu.memory_space<vmem>>, vector<8x128xf32>
    tpu.vector_store %arg3[%c0_7, %c0_8], %13 {strides = array<i32>} : memref<8x128xf32, #tpu.memory_space<vmem>>, vector<8x128xf32>,
    return
  }
  func.func @transform_0(%arg0: i32) -> (i32, i32) {
    %c0_i32 = arith.constant 0 : i32
    %c0_i32_0 = arith.constant 0 : i32
    return %arg0, %c0_i32 : i32, i32
  }
  func.func @transform_1(%arg0: i32) -> (i32, i32) {
    %c0_i32 = arith.constant 0 : i32
    %c0_i32_0 = arith.constant 0 : i32
    return %arg0, %c0_i32 : i32, i32
  }
  func.func @transform_2(%arg0: i32) -> (i32, i32) {
    %c0_i32 = arith.constant 0 : i32
    %c0_i32_0 = arith.constant 0 : i32
    return %arg0, %c0_i32 : i32, i32
  }
}

</mosaic_0001>

<llo_original>
// kernel: tpu_custom_call.1
$region0: #{tpu_custom_call.1}
  #allocation0 [shape = 'u32[]', space=smem, size = 0x4, offset = 0x4, fixed_abs, tag = 'smem constant byte address 0x4 - core index']
  #allocation1 [shape = 'u32[144,128]{1,0:T(1,128)}', space=vmem, size = 0x12000, scoped, tag = 'internal scratch']
  %s0 = inlined_call_operand.hbm [shape: f32[16,128], index: 0, kind: input, shape index: {}]
  %s1 = inlined_call_operand.hbm [shape: f32[16,128], index: 1, kind: input, shape index: {}]
  %s2 = inlined_call_operand.hbm [shape: f32[16,128], index: 2, kind: output, shape index: {}]
  %s3 = sld [smem:[#allocation0]]
  $region49: #{tpu_custom_call.1} parent=0
    _
  %s5 = ssub.s32 1, %s3
  %s6 = scalar_select 0, %s5, %s3
  $region1: #{tpu_custom_call.1} parent=0
    #allocation2 [shape = 'u8[8192]{0}', space=vmem, size = 0x2000, scoped, tag = 'input window, operand 0']
    #allocation3 [shape = 's32[2]{0}', space=sflag, size = 0x8, scoped, tag = 'scoped memory for tpu_custom_call.1']
    #allocation4 [shape = 's32[2]{0}', space=sflag, size = 0x8, scoped, tag = 'scoped memory for tpu_custom_call.1']
    #allocation5 [shape = 'u8[8192]{0}', space=vmem, size = 0x2000, scoped, tag = 'input window, operand 1']
    #allocation6 [shape = 's32[2]{0}', space=sflag, size = 0x8, scoped, tag = 'scoped memory for tpu_custom_call.1']
    #allocation7 [shape = 'u8[8192]{0}', space=vmem, size = 0x2000, scoped, tag = 'output window, operand 0']
    %7 = vsyncpa [#allocation3], 0
    %s8 = scalar_lea.sflag [#allocation3], 1
    %9 = vsyncpa %s8, 0
    %10 = vsyncpa [#allocation6], 0
    %s11 = scalar_lea.sflag [#allocation6], 1
    %12 = vsyncpa %s11, 0
    %13 = vsyncpa [#allocation4], 0
    %s14 = scalar_lea.sflag [#allocation4], 1
    %15 = vsyncpa %s14, 0
    loop: start=0, step=1, limit=4
    $region2: #{tpu_custom_call.1} parent=1 // loop_pre_header
      _
    $region3: #{tpu_custom_call.1} parent=1 // loop_header
      %s17 = sphi 0, %s21
      %p18 = scmp.ge.s32.totalorder %s17, 4
      %s27 = sphi 0, %s29
      %s30 = sphi 0, %s27
      %s31 = sphi 0, %s30
      %s47 = sphi 0, %s31
      %s53 = sphi 0, %s55
      %s56 = sphi 0, %s53
      %s57 = sphi 0, %s56
      %s73 = sphi 0, %s57
      %s79 = sphi 0, %s81
      %s82 = sphi 0, %s79
      %s83 = sphi 0, %s82
      %s99 = sphi 0, %s83
    $region4: #{tpu_custom_call.1} parent=1 // loop_header_branch
      %20 = sbr.rel (%p18) target = $region8
    $region5: #{tpu_custom_call.1} parent=1 // loop_body
      %s22 = ssub.s32 %s17, 1
      %s23 = ssub.s32 %s17, 2
      %s24 = sadd.s32 %s17, 1
      %s25 = ssub.s32 %s17, %s24
      %p26 = scmp.eq.s32.totalorder %s25, 0
      %s28 = sadd.s32 %s27, 1
      %s29 = scalar_select %p26, %s27, %s28
      %p32 = pneg %p26
      %p33 = scmp.eq.s32.totalorder %s17, 1
      %p34 = por %p32, %p33
      %p35 = scmp.ne.s32.totalorder %s27, %s30
      %p36 = scmp.eq.s32.totalorder %s17, 0
      %p37 = por %p35, %p36
      %p38 = scmp.ne.s32.totalorder %s27, %s30
      %p39 = scmp.eq.s32.totalorder %s22, 1
      %p40 = por %p38, %p39
      %p41 = scmp.ne.s32.totalorder %s30, %s31
      %p42 = scmp.eq.s32.totalorder %s22, 0
      %p43 = por %p41, %p42
      %p44 = scmp.ne.s32.totalorder %s30, %s31
      %p45 = scmp.eq.s32.totalorder %s23, 1
      %p46 = por %p44, %p45
      %p48 = scmp.ne.s32.totalorder %s31, %s47
      %p49 = scmp.eq.s32.totalorder %s23, 0
      %p50 = por %p48, %p49
      %s51 = ssub.s32 %s17, %s24
      %p52 = scmp.eq.s32.totalorder %s51, 0
      %s54 = sadd.s32 %s53, 1
      %s55 = scalar_select %p52, %s53, %s54
      %p58 = pneg %p52
      %p59 = scmp.eq.s32.totalorder %s17, 1
      %p60 = por %p58, %p59
      %p61 = scmp.ne.s32.totalorder %s53, %s56
      %p62 = scmp.eq.s32.totalorder %s17, 0
      %p63 = por %p61, %p62
      %p64 = scmp.ne.s32.totalorder %s53, %s56
      %p65 = scmp.eq.s32.totalorder %s22, 1
      %p66 = por %p64, %p65
      %p67 = scmp.ne.s32.totalorder %s56, %s57
      %p68 = scmp.eq.s32.totalorder %s22, 0
      %p69 = por %p67, %p68
      %p70 = scmp.ne.s32.totalorder %s56, %s57
      %p71 = scmp.eq.s32.totalorder %s23, 1
      %p72 = por %p70, %p71
      %p74 = scmp.ne.s32.totalorder %s57, %s73
      %p75 = scmp.eq.s32.totalorder %s23, 0
      %p76 = por %p74, %p75
      %s77 = ssub.s32 %s17, %s24
      %p78 = scmp.eq.s32.totalorder %s77, 0
      %s80 = sadd.s32 %s79, 1
      %s81 = scalar_select %p78, %s79, %s80
      %p84 = pneg %p78
      %p85 = scmp.eq.s32.totalorder %s17, 1
      %p86 = por %p84, %p85
      %p87 = scmp.ne.s32.totalorder %s79, %s82
      %p88 = scmp.eq.s32.totalorder %s17, 0
      %p89 = por %p87, %p88
      %p90 = scmp.ne.s32.totalorder %s79, %s82
      %p91 = scmp.eq.s32.totalorder %s22, 1
      %p92 = por %p90, %p91
      %p93 = scmp.ne.s32.totalorder %s82, %s83
      %p94 = scmp.eq.s32.totalorder %s22, 0
      %p95 = por %p93, %p94
      %p96 = scmp.ne.s32.totalorder %s82, %s83
      %p97 = scmp.eq.s32.totalorder %s23, 1
      %p98 = por %p96, %p97
      %p100 = scmp.ne.s32.totalorder %s83, %s99
      %p101 = scmp.eq.s32.totalorder %s23, 0
      %p102 = por %p100, %p101
      %p103 = scmp.le.s32.totalorder 1, %s17
      %p104 = scmp.lt.s32.totalorder %s17, 3
      %p105 = pnand %p103, %p104
      %p106 = pneg %p105
      // Predicated region
      $region9: #{tpu_custom_call.1} parent=5 // pred_check
        _
      $region10: #{tpu_custom_call.1} parent=5 // pred_check_branch
        %108 = sbr.rel (%p105) target = $region12
      $region11: #{tpu_custom_call.1} parent=5 // pred_region
        %s109 = ssub.s32 %s17, 1
      $region12: #{tpu_custom_call.1} parent=5 // pred_fallthru
        _
      %p110 = scmp.lt.s32.totalorder %s17, 2
      // Predicated region
      $region13: #{tpu_custom_call.1} parent=5 // pred_check
        %p111 = pneg %p110
      $region14: #{tpu_custom_call.1} parent=5 // pred_check_branch
        %113 = sbr.rel (%p111) target = $region16
      $region15: #{tpu_custom_call.1} parent=5 // pred_region
        // Predicated region
        $region17: #{tpu_custom_call.1} parent=15 // pred_check
          %p114 = pneg %p37
        $region18: #{tpu_custom_call.1} parent=15 // pred_check_branch
          %116 = sbr.rel (%p114) target = $region20
        $region19: #{tpu_custom_call.1} parent=15 // pred_region
          %s117 = sand.u32 %s27, 1
          %s118 = scalar_lea.sflag [#allocation3], %s117
          %s119 = sand.u32 %s27, 1
          %s120 = smul.addr %s119, 8
          %s121 = scalar_lea.vmem [#allocation2], %s120
          %s123 = ssub.s32 128, 128
          %124 = vsyncadd %s118, %s123
          %s125 = smul.addr %s17, 128
          %s126 = scalar_lea.hbm %s0, %s125
          %s128 = sshll.u32 %s121, 4
          %s129 = int_to_ptr.vmem [resolvable:$true] %s128
          %131 = dma.hbm_to_vmem [thread:$0]  %s126, 128, %s129, %s118
        $region20: #{tpu_custom_call.1} parent=15 // pred_fallthru
          _
        // Predicated region
        $region21: #{tpu_custom_call.1} parent=15 // pred_check
          %p132 = pneg %p63
        $region22: #{tpu_custom_call.1} parent=15 // pred_check_branch
          %134 = sbr.rel (%p132) target = $region24
        $region23: #{tpu_custom_call.1} parent=15 // pred_region
          %s135 = sand.u32 %s53, 1
          %s136 = scalar_lea.sflag [#allocation6], %s135
          %s137 = sand.u32 %s53, 1
          %s138 = smul.addr %s137, 8
          %s139 = scalar_lea.vmem [#allocation5], %s138
          %s141 = ssub.s32 128, 128
          %142 = vsyncadd %s136, %s141
          %s143 = smul.addr %s17, 128
          %s144 = scalar_lea.hbm %s1, %s143
          %s146 = sshll.u32 %s139, 4
          %s147 = int_to_ptr.vmem [resolvable:$true] %s146
          %149 = dma.hbm_to_vmem [thread:$0]  %s144, 128, %s147, %s136
        $region24: #{tpu_custom_call.1} parent=15 // pred_fallthru
          _
      $region16: #{tpu_custom_call.1} parent=5 // pred_fallthru
        _
      %p150 = scmp.le.s32.totalorder 1, %s17
      %p151 = scmp.lt.s32.totalorder %s17, 3
      %p152 = pnand %p150, %p151
      %p153 = pneg %p152
      // Predicated region
      $region25: #{tpu_custom_call.1} parent=5 // pred_check
        _
      $region26: #{tpu_custom_call.1} parent=5 // pred_check_branch
        %155 = sbr.rel (%p152) target = $region28
      $region27: #{tpu_custom_call.1} parent=5 // pred_region
        %s156 = ssub.s32 %s17, 1
        %s157 = sand.u32 %s30, 1
        %s158 = scalar_lea.sflag [#allocation3], %s157
        %s159 = sand.u32 %s30, 1
        %s160 = smul.addr %s159, 8
        %s161 = scalar_lea.vmem [#allocation2], %s160
        // Predicated region
        $region29: #{tpu_custom_call.1} parent=27 // pred_check
          %p162 = pneg %p43
        $region30: #{tpu_custom_call.1} parent=27 // pred_check_branch
          %164 = sbr.rel (%p162) target = $region32
        $region31: #{tpu_custom_call.1} parent=27 // pred_region
          %165 = dma.done %s158, 128
        $region32: #{tpu_custom_call.1} parent=27 // pred_fallthru
          _
        %s166 = sand.u32 %s56, 1
        %s167 = scalar_lea.sflag [#allocation6], %s166
        %s168 = sand.u32 %s56, 1
        %s169 = smul.addr %s168, 8
        %s170 = scalar_lea.vmem [#allocation5], %s169
        // Predicated region
        $region33: #{tpu_custom_call.1} parent=27 // pred_check
          %p171 = pneg %p69
        $region34: #{tpu_custom_call.1} parent=27 // pred_check_branch
          %173 = sbr.rel (%p171) target = $region36
        $region35: #{tpu_custom_call.1} parent=27 // pred_region
          %174 = dma.done %s167, 128
        $region36: #{tpu_custom_call.1} parent=27 // pred_fallthru
          _
        %s175 = sand.u32 %s30, 1
        %s176 = scalar_lea.sflag [#allocation3], %s175
        %s177 = sand.u32 %s30, 1
        %s178 = smul.addr %s177, 8
        %s179 = scalar_lea.vmem [#allocation2], %s178
        %p180 = pneg %p43
        %p181 = pneg %p40
        %s182 = sand.u32 %s56, 1
        %s183 = scalar_lea.sflag [#allocation6], %s182
        %s184 = sand.u32 %s56, 1
        %s185 = smul.addr %s184, 8
        %s186 = scalar_lea.vmem [#allocation5], %s185
        %p187 = pneg %p69
        %p188 = pneg %p66
        %p189 = pneg %p95
        %p190 = pneg %p92
        %s191 = sand.u32 %s82, 1
        %s192 = scalar_lea.sflag [#allocation4], %s191
        %s193 = sand.u32 %s82, 1
        %s194 = smul.addr %s193, 8
        %s195 = scalar_lea.vmem [#allocation7], %s194
        %v196 = vld [vmem:[%s161] sm:$0xff]
        %v197 = vld [vmem:[%s170] sm:$0xff]
        %v198 = vsub.f32 %v196, %v197
        %v199 = vmul.f32 %v198, %v198
        %vm200 = vcmp.eq.f32.partialorder %v196, 0.0
        %v201 = vsel %vm200, 3.5, 1.0
        %v202 = vmul.f32 %v199, %v201
        %v203 = vadd.f32 %v202, 0.0
        %v204 = vadd.f32 %v203, 0.0
        %205 = vst [vmem:[%s195] sm:$0xff] %v204
        %s206 = sand.u32 %s82, 1
        %s207 = scalar_lea.sflag [#allocation4], %s206
        %s208 = sand.u32 %s82, 1
        %s209 = smul.addr %s208, 8
        %s210 = scalar_lea.vmem [#allocation7], %s209
        // Predicated region
        $region37: #{tpu_custom_call.1} parent=27 // pred_check
          %p211 = pneg %p92
        $region38: #{tpu_custom_call.1} parent=27 // pred_check_branch
          %213 = sbr.rel (%p211) target = $region40
        $region39: #{tpu_custom_call.1} parent=27 // pred_region
          %s215 = ssub.s32 128, 128
          %216 = vsyncadd %s207, %s215
          %s217 = smul.addr %s22, 128
          %s218 = scalar_lea.hbm %s2, %s217
          %s220 = sshll.u32 %s210, 4
          %s221 = int_to_ptr.vmem [resolvable:$true] %s220
          %223 = dma.vmem_to_hbm [thread:$0]  %s221, 128, %s218, %s207
        $region40: #{tpu_custom_call.1} parent=27 // pred_fallthru
          _
      $region28: #{tpu_custom_call.1} parent=5 // pred_fallthru
        _
      %p224 = scmp.le.s32.totalorder 2, %s17
      // Predicated region
      $region41: #{tpu_custom_call.1} parent=5 // pred_check
        %p225 = pneg %p224
      $region42: #{tpu_custom_call.1} parent=5 // pred_check_branch
        %227 = sbr.rel (%p225) target = $region44
      $region43: #{tpu_custom_call.1} parent=5 // pred_region
        %s228 = ssub.s32 %s17, 2
        // Predicated region
        $region45: #{tpu_custom_call.1} parent=43 // pred_check
          %p229 = pneg %p98
        $region46: #{tpu_custom_call.1} parent=43 // pred_check_branch
          %231 = sbr.rel (%p229) target = $region48
        $region47: #{tpu_custom_call.1} parent=43 // pred_region
          %s232 = sand.u32 %s83, 1
          %s233 = scalar_lea.sflag [#allocation4], %s232
          %s234 = sand.u32 %s83, 1
          %s235 = smul.addr %s234, 8
          %s236 = scalar_lea.vmem [#allocation7], %s235
          %237 = dma.done %s233, 128
        $region48: #{tpu_custom_call.1} parent=43 // pred_fallthru
          _
      $region44: #{tpu_custom_call.1} parent=5 // pred_fallthru
        _
    $region6: #{tpu_custom_call.1} parent=1 // loop_footer
      %s21 = sadd.s32 1, %s17
    $region7: #{tpu_custom_call.1} parent=1 // loop_footer_branch
      %16 = sbr.rel target = $region3
    $region8: #{tpu_custom_call.1} parent=1 // loop_exit
      _
    %238 = vsyncpa [#allocation3], 1
    %s239 = scalar_lea.sflag [#allocation3], 1
    %240 = vsyncpa %s239, 1
    %241 = vsyncpa [#allocation6], 1
    %s242 = scalar_lea.sflag [#allocation6], 1
    %243 = vsyncpa %s242, 1
    %244 = vsyncpa [#allocation4], 1
    %s245 = scalar_lea.sflag [#allocation4], 1
    %246 = vsyncpa %s245, 1

</llo_original>
